<compile_context>
chip_gen: v7x
topology: tpu7x:2x2x1
jax: 0.10.0
libtpu: 0.0.40
codegen_flags: <defaults>
</compile_context>

<pallas_src>
import functools
import math

import jax
import jax.numpy as jnp
from jax.experimental import pallas as pl
from jax.experimental.pallas import tpu as pltpu

_LANE_CHOICES = (512, 256, 128)      # lane-dense last dims (multiples of 128)
_TARGET_TILE_BYTES = 4 * 1024 * 1024  # ~4 MiB per tile (amortizes ~0.35us/step overhead)
_VMEM_LIMIT_BYTES = 48 << 20          # safe on v5e/v6e (128 MiB) and v7x (64 MiB/TC)


def _round_up(n, m):
    return ((n + m - 1) // m) * m


def _sublane_pack(dtype):
    # f32 -> 8 sublanes, bf16 -> 16, int8/fp8 -> 32 (packed sublane rows).
    bits = jnp.dtype(dtype).itemsize * 8
    return max(8, 256 // bits)


def _q_hswish_const_kernel(x_ref, o_ref, *, qp, inv_alpha, alpha, offset):
    """Eval-mode LSQ quantization (sym=False) with parameters baked in as constants."""
    x = x_ref[...].astype(jnp.float32)
    data_q = jnp.clip((x + offset) * inv_alpha, 0.0, qp)
    # torch.round and jnp.round both round half-to-even.
    o_ref[...] = (jnp.round(data_q) * alpha - offset).astype(o_ref.dtype)


def _q_hswish_smem_kernel(params_ref, x_ref, o_ref):
    """Same math, parameters supplied via SMEM (for traced / learned bit & alpha).

    params_ref (SMEM, f32[4]) = [qp, 1/alpha, alpha, offset]
    """
    qp = params_ref[0]
    inv_alpha = params_ref[1]
    alpha = params_ref[2]
    offset = params_ref[3]
    x = x_ref[...].astype(jnp.float32)
    data_q = jnp.clip((x + offset) * inv_alpha, 0.0, qp)
    o_ref[...] = (jnp.round(data_q) * alpha - offset).astype(o_ref.dtype)


def q_hswish_forward(x, *, quant=False, bit_param=0.0, alpha=1.0,
                     offset=3.0 / 8.0, donate=False):
    """Forward of Q_HSwish.

    x: float activation array (any shape, e.g. NCHW). Returns identical shape/dtype.
    quant=False -> identity (module default). quant=True -> eval-mode quantization.
    donate=True adds input_output_aliases; only use it when the caller's x buffer is
    genuinely dead afterwards, otherwise XLA inserts a defensive copy.
    """
    if not quant:
        return x  # Q_HSwish.forward: `if self.quant is False: return x`

    orig_shape = x.shape
    total = x.size
    itemsize = jnp.dtype(x.dtype).itemsize
    pack = _sublane_pack(x.dtype)

    # ---- scalar prelude: baked-in constants when static, SMEM params when traced ----
    static_params = all(isinstance(p, (int, float)) for p in (bit_param, alpha, offset))
    if static_params:
        bit = round(2.0 + (1.0 / (1.0 + math.exp(-float(bit_param)))) * 12.0)
        qp = float(2.0 ** bit - 1.0)
        kernel = functools.partial(
            _q_hswish_const_kernel,
            qp=qp, inv_alpha=1.0 / float(alpha), alpha=float(alpha),
            offset=float(offset))
        extra_args = ()
        extra_in_specs = []
    else:
        bit_param_f = jnp.asarray(bit_param, jnp.float32).reshape(())
        alpha_f = jnp.asarray(alpha, jnp.float32).reshape(())
        offset_f = jnp.asarray(offset, jnp.float32).reshape(())
        bit = jnp.round(2.0 + jax.nn.sigmoid(bit_param_f) * 12.0)
        qp = jnp.exp2(bit) - 1.0            # sym=False: Qp = 2**bit - 1, Qn = 0
        params = jnp.stack([qp, 1.0 / alpha_f, alpha_f, offset_f]).astype(jnp.float32)
        kernel = _q_hswish_smem_kernel
        extra_args = (params,)
        extra_in_specs = [pl.BlockSpec(memory_space=pltpu.SMEM)]

    # ---- lane-dense slab without copies: pick the widest lane count dividing total ----
    lane = None
    for cand in _LANE_CHOICES:
        if total % cand == 0:
            lane = cand
            break

    flat = x.reshape(-1)                    # free reshape of a contiguous buffer
    padded = False
    if lane is None:
        # Last resort (size not divisible by 128): pad costs one extra HBM pass.
        lane = 128
        padded_total = _round_up(total, lane)
        flat = jnp.pad(flat, (0, padded_total - total))
        padded = True
    else:
        padded_total = total
    rows = padded_total // lane
    x2d = flat.reshape(rows, lane)

    # ---- row tiling: ~4 MiB tiles, >=2 (>=4) grid steps for mid/large inputs ----
    max_tile_rows = max(pack, (_TARGET_TILE_BYTES // (lane * itemsize)) // pack * pack)
    if rows <= 64:
        tile_rows = rows                    # tiny: single full-extent block
    else:
        target_steps = 4 if rows > 256 else 2
        tile_rows = min(max_tile_rows, _round_up(pl.cdiv(rows, target_steps), pack))
    grid = (pl.cdiv(rows, tile_rows),)

    cost = pl.CostEstimate(
        flops=7 * padded_total,             # add, mul, 2x clip, round, mul, sub
        transcendentals=0,
        bytes_accessed=2 * itemsize * padded_total)

    # Donation only when the slab is the caller's real buffer (no pad temp).
    io_aliases = {len(extra_args): 0} if (donate and not padded) else {}

    out2d = pl.pallas_call(
        kernel,
        out_shape=jax.ShapeDtypeStruct((rows, lane), x2d.dtype),
        grid=grid,
        in_specs=extra_in_specs + [pl.BlockSpec((tile_rows, lane), lambda i: (i, 0))],
        out_specs=pl.BlockSpec((tile_rows, lane), lambda i: (i, 0)),
        input_output_aliases=io_aliases,
        compiler_params=pltpu.CompilerParams(
            dimension_semantics=("parallel",),   # shards steps over v7x's 2 TCs
            vmem_limit_bytes=_VMEM_LIMIT_BYTES,
        ),
        cost_estimate=cost,
    )(*extra_args, x2d)

    out_flat = out2d.reshape(-1)
    if padded:
        out_flat = out_flat[:total]
    return out_flat.reshape(orig_shape)


def _reference_quant(x, bit_param=0.0, alpha=1.0, offset=3.0 / 8.0):
    """Pure-JAX reference of the eval-mode Quantizer forward (sym=False)."""
    bit = jnp.round(2.0 + jax.nn.sigmoid(jnp.asarray(bit_param, jnp.float32)) * 12.0)
    qp = 2.0 ** bit - 1.0
    data_q = jnp.clip((x + offset) / alpha, 0.0, qp)
    return jnp.round(data_q) * alpha - offset


if __name__ == "__main__":
    key = jax.random.PRNGKey(0)

    # NCHW input, matching the PyTorch module's expected activation layout.
    x = jax.random.normal(key, (2, 4, 16, 16), dtype=jnp.float32) * 2.0

    # Path 1: module default (quant=False) -> identity.
    y_identity = jax.block_until_ready(q_hswish_forward(x, quant=False))
    assert jnp.array_equal(y_identity, x)

    # Path 2: quant=True, static params -> baked-constant kernel, lane=512, single block.
    y_quant = jax.block_until_ready(q_hswish_forward(x, quant=True))
    y_ref = _reference_quant(x)
    assert y_quant.shape == x.shape and y_quant.dtype == x.dtype
    assert jnp.allclose(y_quant, y_ref, atol=1e-5, rtol=1e-5)

    # Path 3: 14x14 spatial (size % 128 != 0) -> last-resort pad fallback (lane=128).
    k2 = jax.random.PRNGKey(1)
    x2 = jax.random.normal(k2, (2, 8, 14, 14), dtype=jnp.float32) * 3.0
    y2 = jax.block_until_ready(q_hswish_forward(x2, quant=True))
    assert jnp.allclose(y2, _reference_quant(x2), atol=1e-5, rtol=1e-5)

    # Path 4: larger activation -> multi-step grid (4 steps), pipelined DMA/compute.
    k3 = jax.random.PRNGKey(2)
    x3 = jax.random.normal(k3, (2, 20, 64, 64), dtype=jnp.float32) * 1.5
    y3 = jax.block_until_ready(q_hswish_forward(x3, quant=True))
    assert jnp.allclose(y3, _reference_quant(x3), atol=1e-5, rtol=1e-5)

    # Path 5: size divisible by 256 but not 512 -> exercises the 256-lane choice.
    k4 = jax.random.PRNGKey(3)
    x4 = jax.random.normal(k4, (2, 1, 16, 24), dtype=jnp.float32)
    y4 = jax.block_until_ready(q_hswish_forward(x4, quant=True))
    assert jnp.allclose(y4, _reference_quant(x4), atol=1e-5, rtol=1e-5)

    # Path 6: traced (learned) bit/alpha -> SMEM-params kernel variant.
    k5 = jax.random.PRNGKey(4)
    x5 = jax.random.normal(k5, (2, 4, 8, 32), dtype=jnp.float32) * 2.0
    bit_p = jnp.zeros((1,), jnp.float32)
    alpha_p = jnp.asarray(0.5, jnp.float32)
    y5 = jax.block_until_ready(
        q_hswish_forward(x5, quant=True, bit_param=bit_p, alpha=alpha_p))
    assert jnp.allclose(y5, _reference_quant(x5, bit_param=bit_p, alpha=0.5),
                        atol=1e-5, rtol=1e-5)

    print("KERNEL_OK")
</pallas_src>

<mosaic_0001>
module attributes {stable_mosaic.version = 11 : i64} {
  func.func @_q_hswish_const_kernel(%arg0: i32, %arg1: memref<4x512xf32, #tpu.memory_space<vmem>>, %arg2: memref<4x512xf32, #tpu.memory_space<vmem>>) attributes {dimension_semantics = [#tpu.dimension_semantics<parallel>], iteration_bounds = array<i64: 1>, scalar_prefetch = 0 : i64, scratch_operands = 0 : i64, tpu.core_type = #tpu.core_type<tc>, window_params = [{transform_indices = @transform_0, window_bounds = array<i64: 4, 512>}, {transform_indices = @transform_1, window_bounds = array<i64: 4, 512>}]} {
    %c0 = arith.constant 0 : index
    %c0_0 = arith.constant 0 : index
    %0 = vector.load %arg1[%c0, %c0_0] : memref<4x512xf32, #tpu.memory_space<vmem>>, vector<4x512xf32>
    %cst = arith.constant 3.750000e-01 : f32
    %1 = vector.broadcast %cst : f32 to vector<4x512xf32>
    %2 = arith.addf %0, %1 : vector<4x512xf32>
    %cst_1 = arith.constant 1.000000e+00 : f32
    %3 = vector.broadcast %cst_1 : f32 to vector<4x512xf32>
    %4 = arith.mulf %2, %3 : vector<4x512xf32>
    %cst_2 = arith.constant 0.000000e+00 : f32
    %cst_3 = arith.constant 2.550000e+02 : f32
    %5 = vector.broadcast %cst_2 : f32 to vector<4x512xf32>
    %6 = arith.maximumf %5, %4 : vector<4x512xf32>
    %7 = vector.broadcast %cst_3 : f32 to vector<4x512xf32>
    %8 = arith.minimumf %7, %6 : vector<4x512xf32>
    %9 = math.roundeven %8 : vector<4x512xf32>
    %cst_4 = arith.constant 1.000000e+00 : f32
    %10 = vector.broadcast %cst_4 : f32 to vector<4x512xf32>
    %11 = arith.mulf %9, %10 : vector<4x512xf32>
    %cst_5 = arith.constant 3.750000e-01 : f32
    %12 = vector.broadcast %cst_5 : f32 to vector<4x512xf32>
    %13 = arith.subf %11, %12 : vector<4x512xf32>
    %c0_6 = arith.constant 0 : index
    %c0_7 = arith.constant 0 : index
    %14 = vector.load %arg2[%c0_6, %c0_7] : memref<4x512xf32, #tpu.memory_space<vmem>>, vector<4x512xf32>
    tpu.vector_store %arg2[%c0_6, %c0_7], %13 {strides = array<i32>} : memref<4x512xf32, #tpu.memory_space<vmem>>, vector<4x512xf32>,
    return
  }
  func.func @transform_0(%arg0: i32) -> (i32, i32) {
    %c0_i32 = arith.constant 0 : i32
    %c0_i32_0 = arith.constant 0 : i32
    return %arg0, %c0_i32 : i32, i32
  }
  func.func @transform_1(%arg0: i32) -> (i32, i32) {
    %c0_i32 = arith.constant 0 : i32
    %c0_i32_0 = arith.constant 0 : i32
    return %arg0, %c0_i32 : i32, i32
  }
}

</mosaic_0001>

<llo_original>
// kernel: tpu_custom_call.1
$region0: #{tpu_custom_call.1}
  #allocation0 [shape = 'u32[]', space=smem, size = 0x4, offset = 0x4, fixed_abs, tag = 'smem constant byte address 0x4 - core index']
  #allocation1 [shape = 'u32[144,128]{1,0:T(1,128)}', space=vmem, size = 0x12000, scoped, tag = 'internal scratch']
  %s0 = inlined_call_operand.hbm [shape: f32[4,512], index: 0, kind: input, shape index: {}]
  %s1 = inlined_call_operand.hbm [shape: f32[4,512], index: 1, kind: output, shape index: {}]
  %s2 = sld [smem:[#allocation0]]
  $region18: #{tpu_custom_call.1} parent=0
    _
  %s4 = ssub.s32 1, %s2
  %s5 = scalar_select 0, %s4, %s2
  $region1: #{tpu_custom_call.1} parent=0
    #allocation2 [shape = 'u8[8192]{0}', space=vmem, size = 0x2000, scoped, tag = 'input window, operand 0, single buffered']
    #allocation3 [shape = 's32[1]{0}', space=sflag, size = 0x4, scoped, tag = 'scoped memory for tpu_custom_call.1']
    #allocation4 [shape = 's32[1]{0}', space=sflag, size = 0x4, scoped, tag = 'scoped memory for tpu_custom_call.1']
    #allocation5 [shape = 'u8[8192]{0}', space=vmem, size = 0x2000, scoped, tag = 'output window, operand 0, single buffered']
    %6 = vsyncpa [#allocation3], 0
    %7 = vsyncpa [#allocation4], 0
    // Predicated region
    $region2: #{tpu_custom_call.1} parent=1 // pred_check
      _
    $region3: #{tpu_custom_call.1} parent=1 // pred_check_branch
      %9 = sbr.rel (0) target = $region5
    $region4: #{tpu_custom_call.1} parent=1 // pred_region
      %s11 = ssub.s32 256, 256
      %12 = vsyncadd [#allocation3], %s11
      %s14 = sshll.u32 [#allocation2], 4
      %s15 = int_to_ptr.vmem [resolvable:$true] %s14
      %17 = dma.hbm_to_vmem [thread:$0]  %s0, 256, %s15, [#allocation3]
    $region5: #{tpu_custom_call.1} parent=1 // pred_fallthru
      _
    // Predicated region
    $region6: #{tpu_custom_call.1} parent=1 // pred_check
      _
    $region7: #{tpu_custom_call.1} parent=1 // pred_check_branch
      %19 = sbr.rel (0) target = $region9
    $region8: #{tpu_custom_call.1} parent=1 // pred_region
      %20 = dma.done [#allocation3], 256
    $region9: #{tpu_custom_call.1} parent=1 // pred_fallthru
      _
    %v21 = vld [vmem:[#allocation2] sm:$0xff]
    %v22 = vld [vmem:[#allocation2 + $0x8] sm:$0xff]
    %v23 = vadd.f32 %v21, 0.375
    %v24 = vadd.f32 %v22, 0.375
    %v25 = vmax.f32 %v23, 0.0
    %v26 = vmax.f32 %v24, 0.0
    %v27 = vmin.f32 %v25, 255.0
    %v28 = vmin.f32 %v26, 255.0
    %v29 = vround.ne.pseudo %v27
    %v30 = vround.ne.pseudo %v28
    %v31 = vsub.f32 %v29, 0.375
    %v32 = vsub.f32 %v30, 0.375
    %33 = vst [vmem:[#allocation5] sm:$0xff] %v31
    %34 = vst [vmem:[#allocation5 + $0x8] sm:$0xff] %v32
    // Predicated region
    $region10: #{tpu_custom_call.1} parent=1 // pred_check
      _
    $region11: #{tpu_custom_call.1} parent=1 // pred_check_branch
      %36 = sbr.rel (0) target = $region13
    $region12: #{tpu_custom_call.1} parent=1 // pred_region
      %s38 = ssub.s32 256, 256
      %39 = vsyncadd [#allocation4], %s38
      %s41 = sshll.u32 [#allocation5], 4
      %s42 = int_to_ptr.vmem [resolvable:$true] %s41
      %44 = dma.vmem_to_hbm [thread:$0]  %s42, 256, %s1, [#allocation4]
    $region13: #{tpu_custom_call.1} parent=1 // pred_fallthru
      _
    // Predicated region
    $region14: #{tpu_custom_call.1} parent=1 // pred_check
      _
    $region15: #{tpu_custom_call.1} parent=1 // pred_check_branch
      %46 = sbr.rel (0) target = $region17
    $region16: #{tpu_custom_call.1} parent=1 // pred_region
      %47 = dma.done [#allocation4], 256
    $region17: #{tpu_custom_call.1} parent=1 // pred_fallthru
      _
    %48 = vsyncpa [#allocation3], 1
    %49 = vsyncpa [#allocation4], 1

</llo_original>
